<compile_context>
chip_gen: v5e
topology: v5e:2x2
jax: 0.10.0
libtpu: 0.0.40
codegen_flags: <defaults>
</compile_context>

<pallas_src>
import numpy as np

import jax
import jax.numpy as jnp
from jax.experimental import pallas as pl
from jax.experimental.pallas import tpu as pltpu

KERNEL1 = 3  # residual_kernel_size (first conv)
KERNEL2 = 1  # second conv kernel size


def _elu(v):
    # ELU(alpha=1). exp only sees non-positive inputs -> no inf in dead branch.
    return jnp.where(v > 0, v, jnp.exp(jnp.minimum(v, 0.0)) - 1.0)


def _resblock_kernel(x_ref, halo_ref, w1_ref, b1_ref, w2_ref, bout_ref,
                     wsc_ref, o_ref, imcol):
    # x_ref:    (1, TT, C)   current time tile of x (channels-last), pipelined
    # halo_ref: (1, 1, 2, C) [left, right] halo rows for this tile, pipelined
    # w1_ref:   (3C, H)      k=3 conv as im2col weight [W_tap0; W_tap1; W_tap2]
    # b1_ref:   (1, H)  f32
    # w2_ref:   (H, C)       k=1 conv
    # bout_ref: (1, C)  f32  folded bias (b2 + b_shortcut)
    # wsc_ref:  (C, C)       k=1 shortcut conv (f32 by default)
    # o_ref:    (1, TT, C)
    # imcol:    VMEM (TT, 3C) scratch in the MXU dtype
    TT = x_ref.shape[1]
    C = x_ref.shape[2]
    mxu = w1_ref.dtype

    x_tile = x_ref[0]                                           # (TT, C)

    # ELU of the tile body, cast once to the MXU dtype, staged as the middle
    # im2col tap.
    yb = _elu(x_tile.astype(jnp.float32)).astype(mxu)           # (TT, C)
    imcol[pl.ds(0, TT), pl.ds(C, C)] = yb

    # Shortcut Conv1d(k=1) on raw (unactivated) x — issued now so x_tile is
    # dead before the main chain (true_skip=False). f32 weight by default for
    # residual accuracy; added into the final sum at the end.
    sc = jnp.dot(x_tile.astype(wsc_ref.dtype), wsc_ref[...],
                 preferred_element_type=jnp.float32)            # (TT, C)

    # Taps 0 / 2 are time-shifted copies of the middle tap: ref-to-ref copies
    # (addressed VMEM loads/stores), not sublane-shifted slices of live values.
    imcol[pl.ds(1, TT - 1), pl.ds(0, C)] = imcol[pl.ds(0, TT - 1), pl.ds(C, C)]
    imcol[pl.ds(0, TT - 1), pl.ds(2 * C, C)] = imcol[pl.ds(1, TT - 1), pl.ds(C, C)]

    # Halo rows (already reflect-resolved in the wrapper) complete the im2col.
    h = _elu(halo_ref[0, 0].astype(jnp.float32)).astype(mxu)    # (2, C)
    imcol[pl.ds(0, 1), pl.ds(0, C)] = h[0:1]
    imcol[pl.ds(TT - 1, 1), pl.ds(2 * C, C)] = h[1:2]

    # Conv1d(k=3) as a single lane-dense dot: (TT, 3C) @ (3C, H), f32 accumulate.
    acc = jnp.dot(imcol[...], w1_ref[...], preferred_element_type=jnp.float32)
    y2 = _elu(acc + b1_ref[...])                                # (TT, H)

    # Conv1d(k=1) over channels; folded output bias added once.
    out = jnp.dot(y2.astype(mxu), w2_ref[...],
                  preferred_element_type=jnp.float32)           # (TT, C)

    o_ref[0] = (sc + out + bout_ref[...]).astype(o_ref.dtype)


def _round_up(x, m):
    return ((x + m - 1) // m) * m


def _vmem_estimate(tt, C, H, x_bytes, mxu_bytes, sc_bytes):
    """Rough per-call VMEM footprint: pipelined buffers + scratch + f32 temps."""
    io = 2 * 2 * tt * C * x_bytes                  # x + out tiles, double-buffered
    imcol = tt * 3 * C * mxu_bytes                 # im2col scratch
    halos = 2 * 2 * 2 * C * x_bytes                # tiny halo blocks (dbl-buffered)
    weights = 2 * ((3 * C * H + H * C) * mxu_bytes + C * C * sc_bytes
                   + (H + C) * 4)
    temps = 4 * tt * max(C, H) * 4                 # acc / y2 / out / sc f32 temps
    return io + imcol + halos + weights + temps


def _plan_t_tile(T, C, H, x_dtype, mxu_dtype, sc_dtype, batch,
                 target_block_bytes, vmem_budget_bytes, t_tile=None):
    """Pick the time-tile length TT and padded length Tp (a multiple of TT)."""
    xb = jnp.dtype(x_dtype).itemsize
    mb = jnp.dtype(mxu_dtype).itemsize
    scb = jnp.dtype(sc_dtype).itemsize
    sub = {1: 32, 2: 16}.get(xb, 8)                # min sublane tile per dtype

    if t_tile is not None:
        tt = max(sub, _round_up(int(t_tile), sub))
    else:
        # Byte-targeted tile: ~target_block_bytes of x per pipelined block.
        tt = max(sub, (int(target_block_bytes) // (C * xb)) // sub * sub)
        tt = min(tt, 8192)
        tt = min(tt, _round_up(T, sub))
        # Shrink until the rough VMEM estimate fits the per-generation budget
        # (v7x: 64 MiB/TC; default budget keeps the total well under that).
        while tt > sub and _vmem_estimate(tt, C, H, xb, mb, scb) > vmem_budget_bytes:
            tt = max(sub, (tt // 2) // sub * sub)
        # Keep >= 2 grid steps so both v7x TensorCores get work.
        if batch == 1 and tt >= T and T >= 2 * sub:
            tt = max(sub, (T // 2) // sub * sub)
        # Prefer an exact divisor of T (avoids a padded copy of x) unless it is
        # much smaller than the byte-targeted tile.
        best = 0
        for cand in range(tt, sub - 1, -sub):
            if T % cand == 0:
                best = cand
                break
        if best and best * 4 >= tt:
            tt = best
    t_pad = _round_up(max(T, tt), tt)
    return tt, t_pad


def seanet_resnet_block(x_bct, w1_torch, b1, w2_torch, b2, wsc_torch, bsc, *,
                        t_tile=None, mxu_dtype=jnp.bfloat16,
                        shortcut_dtype=jnp.float32,
                        target_block_bytes=2 * 1024 * 1024,
                        vmem_budget_bytes=40 * 1024 * 1024):
    """SEANetResnetBlock forward (kernel_sizes=[3,1], dilations=[1,1],
    true_skip=False), as instantiated by Encoder.

    x_bct: (B, C, T) PyTorch NCT layout; returns (B, C, T) in x's dtype.
    w1_torch: (H, C, 3), w2_torch: (C, H, 1), wsc_torch: (C, C, 1) effective
    (post weight_norm) conv weights; b1: (H,), b2 / bsc: (C,).
    """
    B, C, T = x_bct.shape
    H = w1_torch.shape[0]
    assert T >= 2, "reflect padding of 1 requires T >= 2"
    assert w1_torch.shape == (H, C, KERNEL1)
    assert w2_torch.shape == (C, H, KERNEL2)
    assert wsc_torch.shape == (C, C, 1)

    TT, T_pad = _plan_t_tile(T, C, H, x_bct.dtype, mxu_dtype, shortcut_dtype,
                             B, target_block_bytes, vmem_budget_bytes, t_tile)
    n_t = T_pad // TT

    # Channels-last so C sits on the lane axis.
    # TODO(synk): if the surrounding model keeps activations channels-last
    # (B, T, C), drop this transpose and the one on the way out.
    x_btc = jnp.transpose(x_bct, (0, 2, 1))                     # (B, T, C)
    if T_pad != T:
        # Pad time so T divides into TT tiles. Row T must hold the reflect
        # value x[T-2] (right tap of the last valid output row); rows beyond
        # it never feed a valid output and get sliced off.
        refl = x_btc[:, T - 2:T - 1, :]
        fill = jnp.zeros((B, T_pad - T - 1, C), x_btc.dtype)
        x_btc = jnp.concatenate([x_btc, refl, fill], axis=1)    # (B, Tp, C)

    # Per-tile halo rows (reflect padding resolved here, statically):
    #   padded[-1] == x[1],  padded[Tp] == x[Tp-2] (only consumed by discarded
    #   rows when Tp > T).
    t_idx = np.arange(n_t)
    left = np.where(t_idx == 0, 1, t_idx * TT - 1)
    right = np.where(t_idx == n_t - 1, T_pad - 2, t_idx * TT + TT)
    halos = jnp.stack([x_btc[:, left, :], x_btc[:, right, :]], axis=2)  # (B,n_t,2,C)

    # Torch conv weights -> matmul layout; cast once in the wrapper.
    # k=3 conv as a (3C, H) im2col weight: row (k*C + c) <-> w1[h, c, k].
    w1 = jnp.transpose(w1_torch, (2, 1, 0)).reshape(KERNEL1 * C, H)
    w1 = w1.astype(mxu_dtype)
    w2 = jnp.transpose(w2_torch[:, :, 0], (1, 0)).astype(mxu_dtype)       # (H, C)
    wsc = jnp.transpose(wsc_torch[:, :, 0], (1, 0)).astype(shortcut_dtype)  # (C, C)
    b1_2d = b1.reshape(1, H).astype(jnp.float32)
    bout_2d = (b2 + bsc).reshape(1, C).astype(jnp.float32)      # folded bias

    est = _vmem_estimate(TT, C, H, jnp.dtype(x_bct.dtype).itemsize,
                         jnp.dtype(mxu_dtype).itemsize,
                         jnp.dtype(shortcut_dtype).itemsize)
    vmem_limit = int(min(96 * 1024 * 1024,
                         max(32 * 1024 * 1024, est + 8 * 1024 * 1024)))

    const2 = lambda b, t: (0, 0)

    out_btc = pl.pallas_call(
        _resblock_kernel,
        out_shape=jax.ShapeDtypeStruct((B, T_pad, C), x_bct.dtype),
        grid=(B, n_t),
        in_specs=[
            # Time-tiled body of x: auto-pipelined / double-buffered.
            pl.BlockSpec((1, TT, C), lambda b, t: (b, t, 0)),
            # Tiny per-tile halo rows: also ride the auto-pipeline.
            pl.BlockSpec((1, 1, 2, C), lambda b, t: (b, t, 0, 0)),
            # Weights / biases: constant index maps -> not re-fetched per tile.
            pl.BlockSpec((KERNEL1 * C, H), const2),
            pl.BlockSpec((1, H), const2),
            pl.BlockSpec((H, C), const2),
            pl.BlockSpec((1, C), const2),
            pl.BlockSpec((C, C), const2),
        ],
        out_specs=pl.BlockSpec((1, TT, C), lambda b, t: (b, t, 0)),
        scratch_shapes=[
            pltpu.VMEM((TT, KERNEL1 * C), mxu_dtype),   # im2col of ELU(x)
        ],
        compiler_params=pltpu.CompilerParams(
            dimension_semantics=("parallel", "parallel"),
            vmem_limit_bytes=vmem_limit),
    )(x_btc, halos, w1, b1_2d, w2, bout_2d, wsc)

    if T_pad != T:
        out_btc = out_btc[:, :T, :]
    return jnp.transpose(out_btc, (0, 2, 1))                    # (B, C, T)


# ---------------------------- pure-JAX reference ----------------------------

def _conv1d(x, w):
    return jax.lax.conv_general_dilated(
        x, w, window_strides=(1,), padding="VALID",
        dimension_numbers=("NCH", "OIH", "NCH"))


def _reference(x_bct, w1, b1, w2, b2, wsc, bsc):
    """f32 reference mirroring the PyTorch SEANetResnetBlock (true_skip=False)."""
    y = _elu(x_bct)
    ypad = jnp.pad(y, ((0, 0), (0, 0), (1, 1)), mode="reflect")
    out1 = _conv1d(ypad, w1) + b1[None, :, None]
    y2 = _elu(out1)
    out2 = _conv1d(y2, w2) + b2[None, :, None]
    sc = _conv1d(x_bct, wsc) + bsc[None, :, None]
    return sc + out2


if __name__ == "__main__":
    B, dim, T = 2, 16, 64
    compress = 2
    hidden = dim // compress  # 8

    key = jax.random.PRNGKey(0)
    kx, k1, kb1, k2, kb2, ks, kbs = jax.random.split(key, 7)

    x = jax.random.normal(kx, (B, dim, T), dtype=jnp.float32)
    # Effective (post weight_norm) conv weights, deterministic init.
    w1 = 0.1 * jax.random.normal(k1, (hidden, dim, KERNEL1), dtype=jnp.float32)
    b1 = 0.1 * jax.random.normal(kb1, (hidden,), dtype=jnp.float32)
    w2 = 0.1 * jax.random.normal(k2, (dim, hidden, KERNEL2), dtype=jnp.float32)
    b2 = 0.1 * jax.random.normal(kb2, (dim,), dtype=jnp.float32)
    wsc = 0.1 * jax.random.normal(ks, (dim, dim, 1), dtype=jnp.float32)
    bsc = 0.1 * jax.random.normal(kbs, (dim,), dtype=jnp.float32)

    ref = _reference(x, w1, b1, w2, b2, wsc, bsc)

    # 1) Exact-math path (f32 MXU operands), forced small tile (64 -> 4 x 16):
    #    exercises interior + boundary halo tiles.
    out_f32 = seanet_resnet_block(x, w1, b1, w2, b2, wsc, bsc,
                                  t_tile=16, mxu_dtype=jnp.float32)
    out_f32 = jax.block_until_ready(out_f32)
    assert out_f32.shape == (B, dim, T)
    assert jnp.allclose(out_f32, ref, atol=2e-4, rtol=2e-4), (
        float(jnp.max(jnp.abs(out_f32 - ref))))

    # 2) Fast path (bf16 MXU operands, f32 accumulate, f32 shortcut).
    out_bf16 = seanet_resnet_block(x, w1, b1, w2, b2, wsc, bsc,
                                   t_tile=16, mxu_dtype=jnp.bfloat16)
    out_bf16 = jax.block_until_ready(out_bf16)
    assert out_bf16.shape == (B, dim, T)
    assert jnp.allclose(out_bf16, ref, atol=5e-2, rtol=5e-2), (
        float(jnp.max(jnp.abs(out_bf16 - ref))))

    # 3) Auto tile planning (byte-targeted TT).
    out_auto = seanet_resnet_block(x, w1, b1, w2, b2, wsc, bsc)
    out_auto = jax.block_until_ready(out_auto)
    assert out_auto.shape == (B, dim, T)
    assert jnp.allclose(out_auto, ref, atol=5e-2, rtol=5e-2), (
        float(jnp.max(jnp.abs(out_auto - ref))))

    # 4) Non-divisible T -> padded-tile path (T=60, TT=16 -> Tp=64).
    x60 = x[:, :, :60]
    ref60 = _reference(x60, w1, b1, w2, b2, wsc, bsc)
    out60 = seanet_resnet_block(x60, w1, b1, w2, b2, wsc, bsc,
                                t_tile=16, mxu_dtype=jnp.float32)
    out60 = jax.block_until_ready(out60)
    assert out60.shape == (B, dim, 60)
    assert jnp.allclose(out60, ref60, atol=2e-4, rtol=2e-4), (
        float(jnp.max(jnp.abs(out60 - ref60))))

    # 5) bf16 activations in / bf16 out (internal accumulation stays f32).
    xb = x.astype(jnp.bfloat16)
    refb = _reference(xb.astype(jnp.float32), w1, b1, w2, b2, wsc, bsc)
    outb = seanet_resnet_block(xb, w1, b1, w2, b2, wsc, bsc,
                               t_tile=16, mxu_dtype=jnp.bfloat16)
    outb = jax.block_until_ready(outb)
    assert outb.dtype == jnp.bfloat16 and outb.shape == (B, dim, T)
    assert jnp.allclose(outb.astype(jnp.float32), refb, atol=1e-1, rtol=1e-1), (
        float(jnp.max(jnp.abs(outb.astype(jnp.float32) - refb))))

    print("KERNEL_OK")
</pallas_src>

<mosaic_0001>
module attributes {stable_mosaic.version = 11 : i64} {
  func.func @_resblock_kernel(%arg0: i32, %arg1: i32, %arg2: memref<1x16x16xf32, #tpu.memory_space<vmem>>, %arg3: memref<1x1x2x16xf32, #tpu.memory_space<vmem>>, %arg4: memref<48x8xf32, #tpu.memory_space<vmem>>, %arg5: memref<1x8xf32, #tpu.memory_space<vmem>>, %arg6: memref<8x16xf32, #tpu.memory_space<vmem>>, %arg7: memref<1x16xf32, #tpu.memory_space<vmem>>, %arg8: memref<16x16xf32, #tpu.memory_space<vmem>>, %arg9: memref<1x16x16xf32, #tpu.memory_space<vmem>>, %arg10: memref<16x48xf32, #tpu.memory_space<vmem>>) attributes {dimension_semantics = [#tpu.dimension_semantics<parallel>, #tpu.dimension_semantics<parallel>], iteration_bounds = array<i64: 2, 4>, scalar_prefetch = 0 : i64, scratch_operands = 1 : i64, tpu.core_type = #tpu.core_type<tc>, window_params = [{transform_indices = @transform_0, window_bounds = array<i64: 1, 16, 16>}, {transform_indices = @transform_1, window_bounds = array<i64: 1, 1, 2, 16>}, {pipeline_mode = #tpu.pipeline_mode<synchronous>, transform_indices = @transform_2, window_bounds = array<i64: 48, 8>}, {pipeline_mode = #tpu.pipeline_mode<synchronous>, transform_indices = @transform_3, window_bounds = array<i64: 1, 8>}, {pipeline_mode = #tpu.pipeline_mode<synchronous>, transform_indices = @transform_4, window_bounds = array<i64: 8, 16>}, {pipeline_mode = #tpu.pipeline_mode<synchronous>, transform_indices = @transform_5, window_bounds = array<i64: 1, 16>}, {pipeline_mode = #tpu.pipeline_mode<synchronous>, transform_indices = @transform_6, window_bounds = array<i64: 16, 16>}, {transform_indices = @transform_7, window_bounds = array<i64: 1, 16, 16>}]} {
    %c0 = arith.constant 0 : index
    %c0_0 = arith.constant 0 : index
    %c0_1 = arith.constant 0 : index
    %0 = vector.load %arg2[%c0, %c0_0, %c0_1] : memref<1x16x16xf32, #tpu.memory_space<vmem>>, vector<1x16x16xf32>
    %1 = vector.shape_cast %0 : vector<1x16x16xf32> to vector<16x16xf32>
    %cst = arith.constant 0.000000e+00 : f32
    %2 = vector.broadcast %cst : f32 to vector<16x16xf32>
    %3 = arith.cmpf ogt, %1, %2 : vector<16x16xf32>
    %cst_2 = arith.constant 0.000000e+00 : f32
    %4 = vector.broadcast %cst_2 : f32 to vector<16x16xf32>
    %5 = arith.minimumf %1, %4 : vector<16x16xf32>
    %6 = math.exp %5 : vector<16x16xf32>
    %cst_3 = arith.constant 1.000000e+00 : f32
    %7 = vector.broadcast %cst_3 : f32 to vector<16x16xf32>
    %8 = arith.subf %6, %7 : vector<16x16xf32>
    %9 = arith.select %3, %1, %8 : vector<16x16xi1>, vector<16x16xf32>
    %c0_4 = arith.constant 0 : index
    %c16 = arith.constant 16 : index
    %10 = vector.load %arg10[%c0_4, %c16] : memref<16x48xf32, #tpu.memory_space<vmem>>, vector<16x16xf32>
    tpu.vector_store %arg10[%c0_4, %c16], %9 {strides = array<i32>} : memref<16x48xf32, #tpu.memory_space<vmem>>, vector<16x16xf32>,
    %c0_5 = arith.constant 0 : index
    %c0_6 = arith.constant 0 : index
    %11 = vector.load %arg8[%c0_5, %c0_6] : memref<16x16xf32, #tpu.memory_space<vmem>>, vector<16x16xf32>
    %cst_7 = arith.constant dense<0.000000e+00> : vector<16x16xf32>
    %12 = tpu.matmul %1, %11, %cst_7 {dimension_numbers = #tpu.dot_dimension_numbers<[1], [0], [0], [1], [0, 0, 1, 1], [], []>} : vector<16x16xf32>, vector<16x16xf32>, vector<16x16xf32> -> vector<16x16xf32>
    %c0_8 = arith.constant 0 : index
    %c16_9 = arith.constant 16 : index
    %13 = vector.load %arg10[%c0_8, %c16_9] : memref<16x48xf32, #tpu.memory_space<vmem>>, vector<15x16xf32>
    %c1 = arith.constant 1 : index
    %c0_10 = arith.constant 0 : index
    %14 = vector.load %arg10[%c1, %c0_10] : memref<16x48xf32, #tpu.memory_space<vmem>>, vector<15x16xf32>
    tpu.vector_store %arg10[%c1, %c0_10], %13 {strides = array<i32>} : memref<16x48xf32, #tpu.memory_space<vmem>>, vector<15x16xf32>,
    %c1_11 = arith.constant 1 : index
    %c16_12 = arith.constant 16 : index
    %15 = vector.load %arg10[%c1_11, %c16_12] : memref<16x48xf32, #tpu.memory_space<vmem>>, vector<15x16xf32>
    %c0_13 = arith.constant 0 : index
    %c32 = arith.constant 32 : index
    %16 = vector.load %arg10[%c0_13, %c32] : memref<16x48xf32, #tpu.memory_space<vmem>>, vector<15x16xf32>
    tpu.vector_store %arg10[%c0_13, %c32], %15 {strides = array<i32>} : memref<16x48xf32, #tpu.memory_space<vmem>>, vector<15x16xf32>,
    %c0_14 = arith.constant 0 : index
    %c0_15 = arith.constant 0 : index
    %c0_16 = arith.constant 0 : index
    %c0_17 = arith.constant 0 : index
    %17 = vector.load %arg3[%c0_14, %c0_15, %c0_16, %c0_17] : memref<1x1x2x16xf32, #tpu.memory_space<vmem>>, vector<1x1x2x16xf32>
    %18 = vector.shape_cast %17 : vector<1x1x2x16xf32> to vector<2x16xf32>
    %cst_18 = arith.constant 0.000000e+00 : f32
    %19 = vector.broadcast %cst_18 : f32 to vector<2x16xf32>
    %20 = arith.cmpf ogt, %18, %19 : vector<2x16xf32>
    %cst_19 = arith.constant 0.000000e+00 : f32
    %21 = vector.broadcast %cst_19 : f32 to vector<2x16xf32>
    %22 = arith.minimumf %18, %21 : vector<2x16xf32>
    %23 = math.exp %22 : vector<2x16xf32>
    %cst_20 = arith.constant 1.000000e+00 : f32
    %24 = vector.broadcast %cst_20 : f32 to vector<2x16xf32>
    %25 = arith.subf %23, %24 : vector<2x16xf32>
    %26 = arith.select %20, %18, %25 : vector<2x16xi1>, vector<2x16xf32>
    %27 = vector.extract_strided_slice %26 {offsets = [0, 0], sizes = [1, 16], strides = [1, 1]} : vector<2x16xf32> to vector<1x16xf32>
    %c0_21 = arith.constant 0 : index
    %c0_22 = arith.constant 0 : index
    %28 = vector.load %arg10[%c0_21, %c0_22] : memref<16x48xf32, #tpu.memory_space<vmem>>, vector<1x16xf32>
    tpu.vector_store %arg10[%c0_21, %c0_22], %27 {strides = array<i32>} : memref<16x48xf32, #tpu.memory_space<vmem>>, vector<1x16xf32>,
    %29 = vector.extract_strided_slice %26 {offsets = [1, 0], sizes = [1, 16], strides = [1, 1]} : vector<2x16xf32> to vector<1x16xf32>
    %c15 = arith.constant 15 : index
    %c32_23 = arith.constant 32 : index
    %30 = vector.load %arg10[%c15, %c32_23] : memref<16x48xf32, #tpu.memory_space<vmem>>, vector<1x16xf32>
    tpu.vector_store %arg10[%c15, %c32_23], %29 {strides = array<i32>} : memref<16x48xf32, #tpu.memory_space<vmem>>, vector<1x16xf32>,
    %c0_24 = arith.constant 0 : index
    %c0_25 = arith.constant 0 : index
    %31 = vector.load %arg10[%c0_24, %c0_25] : memref<16x48xf32, #tpu.memory_space<vmem>>, vector<16x48xf32>
    %c0_26 = arith.constant 0 : index
    %c0_27 = arith.constant 0 : index
    %32 = vector.load %arg4[%c0_26, %c0_27] : memref<48x8xf32, #tpu.memory_space<vmem>>, vector<48x8xf32>
    %cst_28 = arith.constant dense<0.000000e+00> : vector<16x8xf32>
    %33 = tpu.matmul %31, %32, %cst_28 {dimension_numbers = #tpu.dot_dimension_numbers<[1], [0], [0], [1], [0, 0, 1, 1], [], []>} : vector<16x48xf32>, vector<48x8xf32>, vector<16x8xf32> -> vector<16x8xf32>
    %c0_29 = arith.constant 0 : index
    %c0_30 = arith.constant 0 : index
    %34 = vector.load %arg5[%c0_29, %c0_30] : memref<1x8xf32, #tpu.memory_space<vmem>>, vector<1x8xf32>
    %35 = vector.broadcast %34 : vector<1x8xf32> to vector<16x8xf32>
    %36 = arith.addf %33, %35 : vector<16x8xf32>
    %cst_31 = arith.constant 0.000000e+00 : f32
    %37 = vector.broadcast %cst_31 : f32 to vector<16x8xf32>
    %38 = arith.cmpf ogt, %36, %37 : vector<16x8xf32>
    %cst_32 = arith.constant 0.000000e+00 : f32
    %39 = vector.broadcast %cst_32 : f32 to vector<16x8xf32>
    %40 = arith.minimumf %36, %39 : vector<16x8xf32>
    %41 = math.exp %40 : vector<16x8xf32>
    %cst_33 = arith.constant 1.000000e+00 : f32
    %42 = vector.broadcast %cst_33 : f32 to vector<16x8xf32>
    %43 = arith.subf %41, %42 : vector<16x8xf32>
    %44 = arith.select %38, %36, %43 : vector<16x8xi1>, vector<16x8xf32>
    %c0_34 = arith.constant 0 : index
    %c0_35 = arith.constant 0 : index
    %45 = vector.load %arg6[%c0_34, %c0_35] : memref<8x16xf32, #tpu.memory_space<vmem>>, vector<8x16xf32>
    %cst_36 = arith.constant dense<0.000000e+00> : vector<16x16xf32>
    %46 = tpu.matmul %44, %45, %cst_36 {dimension_numbers = #tpu.dot_dimension_numbers<[1], [0], [0], [1], [0, 0, 1, 1], [], []>} : vector<16x8xf32>, vector<8x16xf32>, vector<16x16xf32> -> vector<16x16xf32>
    %47 = arith.addf %12, %46 : vector<16x16xf32>
    %c0_37 = arith.constant 0 : index
    %c0_38 = arith.constant 0 : index
    %48 = vector.load %arg7[%c0_37, %c0_38] : memref<1x16xf32, #tpu.memory_space<vmem>>, vector<1x16xf32>
    %49 = vector.broadcast %48 : vector<1x16xf32> to vector<16x16xf32>
    %50 = arith.addf %47, %49 : vector<16x16xf32>
    %c0_39 = arith.constant 0 : index
    %c0_40 = arith.constant 0 : index
    %c0_41 = arith.constant 0 : index
    %51 = vector.load %arg9[%c0_39, %c0_40, %c0_41] : memref<1x16x16xf32, #tpu.memory_space<vmem>>, vector<1x16x16xf32>
    %52 = vector.shape_cast %51 : vector<1x16x16xf32> to vector<16x16xf32>
    %53 = vector.shape_cast %50 : vector<16x16xf32> to vector<1x16x16xf32>
    tpu.vector_store %arg9[%c0_39, %c0_40, %c0_41], %53 {strides = array<i32>} : memref<1x16x16xf32, #tpu.memory_space<vmem>>, vector<1x16x16xf32>,
    return
  }
  func.func @transform_0(%arg0: i32, %arg1: i32) -> (i32, i32, i32) {
    %c0_i32 = arith.constant 0 : i32
    %c0_i32_0 = arith.constant 0 : i32
    return %arg0, %arg1, %c0_i32 : i32, i32, i32
  }
  func.func @transform_1(%arg0: i32, %arg1: i32) -> (i32, i32, i32, i32) {
    %c0_i32 = arith.constant 0 : i32
    %c0_i32_0 = arith.constant 0 : i32
    %c0_i32_1 = arith.constant 0 : i32
    return %arg0, %arg1, %c0_i32, %c0_i32_0 : i32, i32, i32, i32
  }
  func.func @transform_2(%arg0: i32, %arg1: i32) -> (i32, i32) {
    %c0_i32 = arith.constant 0 : i32
    %c0_i32_0 = arith.constant 0 : i32
    %c0_i32_1 = arith.constant 0 : i32
    return %c0_i32, %c0_i32_0 : i32, i32
  }
  func.func @transform_3(%arg0: i32, %arg1: i32) -> (i32, i32) {
    %c0_i32 = arith.constant 0 : i32
    %c0_i32_0 = arith.constant 0 : i32
    %c0_i32_1 = arith.constant 0 : i32
    return %c0_i32, %c0_i32_0 : i32, i32
  }
  func.func @transform_4(%arg0: i32, %arg1: i32) -> (i32, i32) {
    %c0_i32 = arith.constant 0 : i32
    %c0_i32_0 = arith.constant 0 : i32
    %c0_i32_1 = arith.constant 0 : i32
    return %c0_i32, %c0_i32_0 : i32, i32
  }
  func.func @transform_5(%arg0: i32, %arg1: i32) -> (i32, i32) {
    %c0_i32 = arith.constant 0 : i32
    %c0_i32_0 = arith.constant 0 : i32
    %c0_i32_1 = arith.constant 0 : i32
    return %c0_i32, %c0_i32_0 : i32, i32
  }
  func.func @transform_6(%arg0: i32, %arg1: i32) -> (i32, i32) {
    %c0_i32 = arith.constant 0 : i32
    %c0_i32_0 = arith.constant 0 : i32
    %c0_i32_1 = arith.constant 0 : i32
    return %c0_i32, %c0_i32_0 : i32, i32
  }
  func.func @transform_7(%arg0: i32, %arg1: i32) -> (i32, i32, i32) {
    %c0_i32 = arith.constant 0 : i32
    %c0_i32_0 = arith.constant 0 : i32
    return %arg0, %arg1, %c0_i32 : i32, i32, i32
  }
}

</mosaic_0001>

<llo_original>
// kernel: tpu_custom_call.1
$region0: #{tpu_custom_call.1}
  #allocation0 [shape = 'u32[]', space=smem, size = 0x4, offset = 0x4, fixed_abs, tag = 'smem constant byte address 0x4 - core index']
  #allocation1 [shape = 'u32[72,128]{1,0:T(1,128)}', space=vmem, size = 0x9000, scoped, tag = 'internal scratch']
  #allocation2 [shape = 'f32[16,48]{1,0:T(8,128)}', space=vmem, size = 0x2000, scoped, tag = 'scratch operand']
  %s0 = inlined_call_operand.vmem [shape: f32[2,64,16], index: 0, kind: input, shape index: {}]
  %s1 = inlined_call_operand.vmem [shape: f32[2,4,2,16], index: 1, kind: input, shape index: {}]
  %s2 = inlined_call_operand.vmem [shape: f32[48,8], index: 2, kind: input, shape index: {}]
  %s3 = inlined_call_operand.vmem [shape: f32[1,8], index: 3, kind: input, shape index: {}]
  %s4 = inlined_call_operand.vmem [shape: f32[8,16], index: 4, kind: input, shape index: {}]
  %s5 = inlined_call_operand.vmem [shape: f32[1,16], index: 5, kind: input, shape index: {}]
  %s6 = inlined_call_operand.vmem [shape: f32[16,16], index: 6, kind: input, shape index: {}]
  %s7 = inlined_call_operand.vmem [shape: f32[2,64,16], index: 7, kind: output, shape index: {}]
  %s8 = sld [smem:[#allocation0]]
  $region61: #{tpu_custom_call.1} parent=0
    _
  %s10 = ssub.s32 1, %s8
  %s11 = scalar_select 0, %s10, %s8
  loop: start=0, step=1, limit=10
  $region2: #{tpu_custom_call.1} parent=0 // loop_pre_header
    _
  $region3: #{tpu_custom_call.1} parent=0 // loop_header
    %s13 = sphi 0, %s17
    %p14 = scmp.ge.s32.totalorder %s13, 10
    %s20 = sphi 0, %s32
    %s21 = sphi 0, %s28
    %s22 = sphi 0, %s20
    %s23 = sphi 0, %s21
    %s24 = sphi 0, %s22
    %s25 = sphi 0, %s23
    %s37 = sphi 0, %s39
    %s40 = sphi 0, %s37
    %s41 = sphi 0, %s40
    %s57 = sphi 0, %s41
    %s65 = sphi 0, %s67
    %s68 = sphi 0, %s65
    %s69 = sphi 0, %s68
    %s85 = sphi 0, %s69
    %s89 = sphi 0, %s89
    %s91 = sphi 0, %s89
    %s92 = sphi 0, %s91
    %s106 = sphi 0, %s92
    %s110 = sphi 0, %s110
    %s112 = sphi 0, %s110
    %s113 = sphi 0, %s112
    %s127 = sphi 0, %s113
    %s131 = sphi 0, %s131
    %s133 = sphi 0, %s131
    %s134 = sphi 0, %s133
    %s148 = sphi 0, %s134
    %s152 = sphi 0, %s152
    %s154 = sphi 0, %s152
    %s155 = sphi 0, %s154
    %s169 = sphi 0, %s155
    %s173 = sphi 0, %s173
    %s175 = sphi 0, %s173
    %s176 = sphi 0, %s175
    %s190 = sphi 0, %s176
    %s198 = sphi 0, %s200
    %s201 = sphi 0, %s198
    %s202 = sphi 0, %s201
    %s218 = sphi 0, %s202
  $region4: #{tpu_custom_call.1} parent=0 // loop_header_branch
    %16 = sbr.rel (%p14) target = $region8
  $region5: #{tpu_custom_call.1} parent=0 // loop_body
    %s18 = ssub.s32 %s13, 1
    %s19 = ssub.s32 %s13, 2
    %s26 = sadd.s32 1, %s21
    %p27 = scmp.ge.s32.totalorder %s26, 4
    %s28 = scalar_select %p27, 0, %s26
    %s29 = sadd.s32 1, %s20
    %s30 = scalar_select %p27, %s29, %s20
    %p31 = scmp.ge.s32.totalorder %s30, 2
    %s32 = scalar_select %p31, 0, %s30
    %s33 = ssub.s32 %s20, %s32
    %s34 = ssub.s32 %s21, %s28
    %s35 = sor.u32 %s33, %s34
    %p36 = scmp.eq.s32.totalorder %s35, 0
    %s38 = sadd.s32 %s37, 1
    %s39 = scalar_select %p36, %s37, %s38
    %p42 = pneg %p36
    %p43 = scmp.eq.s32.totalorder %s13, 7
    %p44 = por %p42, %p43
    %p45 = scmp.ne.s32.totalorder %s37, %s40
    %p46 = scmp.eq.s32.totalorder %s13, 0
    %p47 = por %p45, %p46
    %p48 = scmp.ne.s32.totalorder %s37, %s40
    %p49 = scmp.eq.s32.totalorder %s18, 7
    %p50 = por %p48, %p49
    %p51 = scmp.ne.s32.totalorder %s40, %s41
    %p52 = scmp.eq.s32.totalorder %s18, 0
    %p53 = por %p51, %p52
    %p54 = scmp.ne.s32.totalorder %s40, %s41
    %p55 = scmp.eq.s32.totalorder %s19, 7
    %p56 = por %p54, %p55
    %p58 = scmp.ne.s32.totalorder %s41, %s57
    %p59 = scmp.eq.s32.totalorder %s19, 0
    %p60 = por %p58, %p59
    %s61 = ssub.s32 %s20, %s32
    %s62 = ssub.s32 %s21, %s28
    %s63 = sor.u32 %s61, %s62
    %p64 = scmp.eq.s32.totalorder %s63, 0
    %s66 = sadd.s32 %s65, 1
    %s67 = scalar_select %p64, %s65, %s66
    %p70 = pneg %p64
    %p71 = scmp.eq.s32.totalorder %s13, 7
    %p72 = por %p70, %p71
    %p73 = scmp.ne.s32.totalorder %s65, %s68
    %p74 = scmp.eq.s32.totalorder %s13, 0
    %p75 = por %p73, %p74
    %p76 = scmp.ne.s32.totalorder %s65, %s68
    %p77 = scmp.eq.s32.totalorder %s18, 7
    %p78 = por %p76, %p77
    %p79 = scmp.ne.s32.totalorder %s68, %s69
    %p80 = scmp.eq.s32.totalorder %s18, 0
    %p81 = por %p79, %p80
    %p82 = scmp.ne.s32.totalorder %s68, %s69
    %p83 = scmp.eq.s32.totalorder %s19, 7
    %p84 = por %p82, %p83
    %p86 = scmp.ne.s32.totalorder %s69, %s85
    %p87 = scmp.eq.s32.totalorder %s19, 0
    %p88 = por %p86, %p87
    %s90 = sadd.s32 %s89, 1
    %p93 = scmp.eq.s32.totalorder %s13, 7
    %p94 = scmp.ne.s32.totalorder %s89, %s91
    %p95 = scmp.eq.s32.totalorder %s13, 0
    %p96 = por %p94, %p95
    %p97 = scmp.ne.s32.totalorder %s89, %s91
    %p98 = scmp.eq.s32.totalorder %s18, 7
    %p99 = por %p97, %p98
    %p100 = scmp.ne.s32.totalorder %s91, %s92
    %p101 = scmp.eq.s32.totalorder %s18, 0
    %p102 = por %p100, %p101
    %p103 = scmp.ne.s32.totalorder %s91, %s92
    %p104 = scmp.eq.s32.totalorder %s19, 7
    %p105 = por %p103, %p104
    %p107 = scmp.ne.s32.totalorder %s92, %s106
    %p108 = scmp.eq.s32.totalorder %s19, 0
    %p109 = por %p107, %p108
    %s111 = sadd.s32 %s110, 1
    %p114 = scmp.eq.s32.totalorder %s13, 7
    %p115 = scmp.ne.s32.totalorder %s110, %s112
    %p116 = scmp.eq.s32.totalorder %s13, 0
    %p117 = por %p115, %p116
    %p118 = scmp.ne.s32.totalorder %s110, %s112
    %p119 = scmp.eq.s32.totalorder %s18, 7
    %p120 = por %p118, %p119
    %p121 = scmp.ne.s32.totalorder %s112, %s113
    %p122 = scmp.eq.s32.totalorder %s18, 0
    %p123 = por %p121, %p122
    %p124 = scmp.ne.s32.totalorder %s112, %s113
    %p125 = scmp.eq.s32.totalorder %s19, 7
    %p126 = por %p124, %p125
    %p128 = scmp.ne.s32.totalorder %s113, %s127
    %p129 = scmp.eq.s32.totalorder %s19, 0
    %p130 = por %p128, %p129
    %s132 = sadd.s32 %s131, 1
    %p135 = scmp.eq.s32.totalorder %s13, 7
    %p136 = scmp.ne.s32.totalorder %s131, %s133
    %p137 = scmp.eq.s32.totalorder %s13, 0
    %p138 = por %p136, %p137
    %p139 = scmp.ne.s32.totalorder %s131, %s133
    %p140 = scmp.eq.s32.totalorder %s18, 7
    %p141 = por %p139, %p140
    %p142 = scmp.ne.s32.totalorder %s133, %s134
    %p143 = scmp.eq.s32.totalorder %s18, 0
    %p144 = por %p142, %p143
    %p145 = scmp.ne.s32.totalorder %s133, %s134
    %p146 = scmp.eq.s32.totalorder %s19, 7
    %p147 = por %p145, %p146
    %p149 = scmp.ne.s32.totalorder %s134, %s148
    %p150 = scmp.eq.s32.totalorder %s19, 0
    %p151 = por %p149, %p150
    %s153 = sadd.s32 %s152, 1
    %p156 = scmp.eq.s32.totalorder %s13, 7
    %p157 = scmp.ne.s32.totalorder %s152, %s154
    %p158 = scmp.eq.s32.totalorder %s13, 0
    %p159 = por %p157, %p158
    %p160 = scmp.ne.s32.totalorder %s152, %s154
    %p161 = scmp.eq.s32.totalorder %s18, 7
    %p162 = por %p160, %p161
    %p163 = scmp.ne.s32.totalorder %s154, %s155
    %p164 = scmp.eq.s32.totalorder %s18, 0
    %p165 = por %p163, %p164
    %p166 = scmp.ne.s32.totalorder %s154, %s155
    %p167 = scmp.eq.s32.totalorder %s19, 7
    %p168 = por %p166, %p167
    %p170 = scmp.ne.s32.totalorder %s155, %s169
    %p171 = scmp.eq.s32.totalorder %s19, 0
    %p172 = por %p170, %p171
    %s174 = sadd.s32 %s173, 1
    %p177 = scmp.eq.s32.totalorder %s13, 7
    %p178 = scmp.ne.s32.totalorder %s173, %s175
    %p179 = scmp.eq.s32.totalorder %s13, 0
    %p180 = por %p178, %p179
    %p181 = scmp.ne.s32.totalorder %s173, %s175
    %p182 = scmp.eq.s32.totalorder %s18, 7
    %p183 = por %p181, %p182
    %p184 = scmp.ne.s32.totalorder %s175, %s176
    %p185 = scmp.eq.s32.totalorder %s18, 0
    %p186 = por %p184, %p185
    %p187 = scmp.ne.s32.totalorder %s175, %s176
    %p188 = scmp.eq.s32.totalorder %s19, 7
    %p189 = por %p187, %p188
    %p191 = scmp.ne.s32.totalorder %s176, %s190
    %p192 = scmp.eq.s32.totalorder %s19, 0
    %p193 = por %p191, %p192
    %s194 = ssub.s32 %s20, %s32
    %s195 = ssub.s32 %s21, %s28
    %s196 = sor.u32 %s194, %s195
    %p197 = scmp.eq.s32.totalorder %s196, 0
    %s199 = sadd.s32 %s198, 1
    %s200 = scalar_select %p197, %s198, %s199
    %p203 = pneg %p197
    %p204 = scmp.eq.s32.totalorder %s13, 7
    %p205 = por %p203, %p204
    %p206 = scmp.ne.s32.totalorder %s198, %s201
    %p207 = scmp.eq.s32.totalorder %s13, 0
    %p208 = por %p206, %p207
    %p209 = scmp.ne.s32.totalorder %s198, %s201
    %p210 = scmp.eq.s32.totalorder %s18, 7
    %p211 = por %p209, %p210
    %p212 = scmp.ne.s32.totalorder %s201, %s202
    %p213 = scmp.eq.s32.totalorder %s18, 0
    %p214 = por %p212, %p213
    %p215 = scmp.ne.s32.totalorder %s201, %s202
    %p216 = scmp.eq.s32.totalorder %s19, 7
    %p217 = por %p215, %p216
    %p219 = scmp.ne.s32.totalorder %s202, %s218
    %p220 = scmp.eq.s32.totalorder %s19, 0
    %p221 = por %p219, %p220
    %p222 = scmp.le.s32.totalorder 1, %s13
    %p223 = scmp.lt.s32.totalorder %s13, 9
    %p224 = pnand %p222, %p223
    %p225 = pneg %p224
    // Predicated region
    $region9: #{tpu_custom_call.1} parent=5 // pred_check
      _
    $region10: #{tpu_custom_call.1} parent=5 // pred_check_branch
      %227 = sbr.rel (%p224) target = $region12
    $region11: #{tpu_custom_call.1} parent=5 // pred_region
      %s228 = ssub.s32 %s13, 1
      // Predicated region
      $region13: #{tpu_custom_call.1} parent=11 // pred_check
        %p229 = pneg %p102
      $region14: #{tpu_custom_call.1} parent=11 // pred_check_branch
        %231 = sbr.rel (%p229) target = $region16
      $region15: #{tpu_custom_call.1} parent=11 // pred_region
        _
      $region16: #{tpu_custom_call.1} parent=11 // pred_fallthru
        _
      // Predicated region
      $region17: #{tpu_custom_call.1} parent=11 // pred_check
        %p232 = pneg %p123
      $region18: #{tpu_custom_call.1} parent=11 // pred_check_branch
        %234 = sbr.rel (%p232) target = $region20
      $region19: #{tpu_custom_call.1} parent=11 // pred_region
        _
      $region20: #{tpu_custom_call.1} parent=11 // pred_fallthru
        _
      // Predicated region
      $region21: #{tpu_custom_call.1} parent=11 // pred_check
        %p235 = pneg %p144
      $region22: #{tpu_custom_call.1} parent=11 // pred_check_branch
        %237 = sbr.rel (%p235) target = $region24
      $region23: #{tpu_custom_call.1} parent=11 // pred_region
        _
      $region24: #{tpu_custom_call.1} parent=11 // pred_fallthru
        _
      // Predicated region
      $region25: #{tpu_custom_call.1} parent=11 // pred_check
        %p238 = pneg %p165
      $region26: #{tpu_custom_call.1} parent=11 // pred_check_branch
        %240 = sbr.rel (%p238) target = $region28
      $region27: #{tpu_custom_call.1} parent=11 // pred_region
        _
      $region28: #{tpu_custom_call.1} parent=11 // pred_fallthru
        _
      // Predicated region
      $region29: #{tpu_custom_call.1} parent=11 // pred_check
        %p241 = pneg %p186
      $region30: #{tpu_custom_call.1} parent=11 // pred_check_branch
        %243 = sbr.rel (%p241) target = $region32
      $region31: #{tpu_custom_call.1} parent=11 // pred_region
        _
      $region32: #{tpu_custom_call.1} parent=11 // pred_fallthru
        _
    $region12: #{tpu_custom_call.1} parent=5 // pred_fallthru
      _
    %p244 = scmp.lt.s32.totalorder %s13, 8
    // Predicated region
    $region33: #{tpu_custom_call.1} parent=5 // pred_check
      %p245 = pneg %p244
    $region34: #{tpu_custom_call.1} parent=5 // pred_check_branch
      %247 = sbr.rel (%p245) target = $region36
    $region35: #{tpu_custom_call.1} parent=5 // pred_region
      // Predicated region
      $region37: #{tpu_custom_call.1} parent=35 // pred_check
        %p248 = pneg %p47
      $region38: #{tpu_custom_call.1} parent=35 // pred_check_branch
        %250 = sbr.rel (%p248) target = $region40
      $region39: #{tpu_custom_call.1} parent=35 // pred_region
        %s251 = smul.u32 2, %s21
        %p252 = scmp.lt.s32.totalorder %s20, 1
        %s253 = scalar_select %p252, %s20, 1
        %p254 = scmp.lt.s32.totalorder %s251, 7
        %s255 = scalar_select %p254, %s251, 7
        %s256 = smul.addr %s253, 8
        %s257 = sadd.s32 %s255, %s256
        %s258 = smul.addr %s257, 8
        %s259 = scalar_lea.vmem %s0, %s258
        %s260 = smul.u32 2, %s21
      $region40: #{tpu_custom_call.1} parent=35 // pred_fallthru
        _
      // Predicated region
      $region41: #{tpu_custom_call.1} parent=35 // pred_check
        %p261 = pneg %p75
      $region42: #{tpu_custom_call.1} parent=35 // pred_check_branch
        %263 = sbr.rel (%p261) target = $region44
      $region43: #{tpu_custom_call.1} parent=35 // pred_region
        %p264 = scmp.lt.s32.totalorder %s20, 1
        %s265 = scalar_select %p264, %s20, 1
        %p266 = scmp.lt.s32.totalorder %s21, 3
        %s267 = scalar_select %p266, %s21, 3
        %s268 = smul.addr %s265, 4
        %s269 = sadd.s32 %s267, %s268
        %s270 = smul.addr %s269, 2
        %s271 = scalar_lea.vmem %s1, %s270
      $region44: #{tpu_custom_call.1} parent=35 // pred_fallthru
        _
    $region36: #{tpu_custom_call.1} parent=5 // pred_fallthru
      _
    %p272 = scmp.le.s32.totalorder 1, %s13
    %p273 = scmp.lt.s32.totalorder %s13, 9
    %p274 = pnand %p272, %p273
    %p275 = pneg %p274
    // Predicated region
    $region45: #{tpu_custom_call.1} parent=5 // pred_check
      _
    $region46: #{tpu_custom_call.1} parent=5 // pred_check_branch
      %277 = sbr.rel (%p274) target = $region48
    $region47: #{tpu_custom_call.1} parent=5 // pred_region
      %s278 = ssub.s32 %s13, 1
      %s279 = smul.u32 2, %s23
      %p280 = scmp.lt.s32.totalorder %s22, 1
      %s281 = scalar_select %p280, %s22, 1
      %p282 = scmp.lt.s32.totalorder %s279, 7
      %s283 = scalar_select %p282, %s279, 7
      %s284 = smul.addr %s281, 8
      %s285 = sadd.s32 %s283, %s284
      %s286 = smul.addr %s285, 8
      %s287 = scalar_lea.vmem %s0, %s286
      %p288 = pneg %p53
      %p289 = pneg %p50
      %p290 = scmp.lt.s32.totalorder %s22, 1
      %s291 = scalar_select %p290, %s22, 1
      %p292 = scmp.lt.s32.totalorder %s23, 3
      %s293 = scalar_select %p292, %s23, 3
      %s294 = smul.addr %s291, 4
      %s295 = sadd.s32 %s293, %s294
      %s296 = smul.addr %s295, 2
      %s297 = scalar_lea.vmem %s1, %s296
      %p298 = pneg %p81
      %p299 = pneg %p78
      %p300 = pneg %p102
      %p301 = pneg %p99
      %p302 = pneg %p123
      %p303 = pneg %p120
      %p304 = pneg %p144
      %p305 = pneg %p141
      %p306 = pneg %p165
      %p307 = pneg %p162
      %p308 = pneg %p186
      %p309 = pneg %p183
      %p310 = pneg %p214
      %p311 = pneg %p211
      %s312 = smul.u32 2, %s23
      %p313 = scmp.lt.s32.totalorder %s22, 1
      %s314 = scalar_select %p313, %s22, 1
      %p315 = scmp.lt.s32.totalorder %s312, 7
      %s316 = scalar_select %p315, %s312, 7
      %s317 = smul.addr %s314, 8
      %s318 = sadd.s32 %s316, %s317
      %s319 = smul.addr %s318, 8
      %s320 = scalar_lea.vmem %s7, %s319
      %s321 = smul.u32 2, %s23
      %p322 = scmp.lt.s32.totalorder %s22, 1
      %s323 = scalar_select %p322, %s22, 1
      %p324 = scmp.lt.s32.totalorder %s321, 7
      %s325 = scalar_select %p324, %s321, 7
      %s326 = smul.addr %s323, 8
      %s327 = sadd.s32 %s325, %s326
      %s328 = smul.addr %s327, 8
      %s329 = scalar_lea.vmem %s0, %s328
      %s330 = smul.u32 2, %s23
      %p331 = scmp.lt.s32.totalorder %s22, 1
      %s332 = scalar_select %p331, %s22, 1
      %p333 = scmp.lt.s32.totalorder %s23, 3
      %s334 = scalar_select %p333, %s23, 3
      %s335 = smul.addr %s332, 4
      %s336 = sadd.s32 %s334, %s335
      %s337 = smul.addr %s336, 2
      %s338 = scalar_lea.vmem %s1, %s337
      %s339 = smul.u32 2, %s23
      %p340 = scmp.lt.s32.totalorder %s22, 1
      %s341 = scalar_select %p340, %s22, 1
      %p342 = scmp.lt.s32.totalorder %s339, 7
      %s343 = scalar_select %p342, %s339, 7
      %s344 = smul.addr %s341, 8
      %s345 = sadd.s32 %s343, %s344
      %s346 = smul.addr %s345, 8
      %s347 = scalar_lea.vmem %s7, %s346
      %s348 = smul.u32 2, %s23
      %v349 = vld [vmem:[%s329] sm:$0xff]
      %v350 = vld [vmem:[%s329 + $0x8] sm:$0xff]
      %vm351 = vcmp.gt.f32.partialorder %v349, 0.0
      %vm352 = vcmp.gt.f32.partialorder %v350, 0.0
      %v353 = vmin.f32 %v349, 0.0
      %v354 = vmin.f32 %v350, 0.0
      %v355 = vmul.f32 %v353, 1.442695
      %v356 = vpow.pop %v355
      %v357 = vmul.f32 %v354, 1.442695
      %v358 = vpow.pop %v357
      %v359 = vsub.f32 %v356, 1.0
      %v360 = vsub.f32 %v358, 1.0
      %v361 = vsel %vm351, %v349, %v359
      %v362 = vsel %vm352, %v350, %v360
      %365 = vrot.lane.b32.xlu0 %v361, 16
      %v366 = vpop.permute.xlu0 %365
      %367 = vrot.lane.b32.xlu0 %v362, 16
      %v368 = vpop.permute.xlu0 %367
      %vm371 = vcmask 261248
      %372 = vst.msk [vmem:[#allocation2] sm:$0xff] %vm371, %v366
      %373 = vst.msk [vmem:[#allocation2 + $0x8] sm:$0xff] %vm371, %v368
      %v374 = vld [vmem:[%s6] sm:$0xff]
      %v375 = vld [vmem:[%s6 + $0x8] sm:$0xff]
      %v376 = vld [vmem:[#allocation2] sm:$0xff]
      %v377 = vld [vmem:[#allocation2 + $0x8] sm:$0x7f]
      %380 = vrot.lane.b32.xlu0 %v376, 112
      %v381 = vpop.permute.xlu0 %380
      %382 = vrot.lane.b32.xlu0 %v377, 112
      %v383 = vpop.permute.xlu0 %382
      %vm386 = vcmask 130048
      %387 = vst.msk [vmem:[#allocation2 + $0x1] sm:$0xff] %vm386, %v381
      %vm388 = vcmask 129024
      %389 = vst.msk [vmem:[#allocation2 + $0x9] sm:$0x7f] %vm388, %v383
      %v390 = vld [vmem:[#allocation2 + $0x1] sm:$0xff]
      %v391 = vld [vmem:[#allocation2 + $0x9] sm:$0x7f]
      %394 = vrot.lane.b32.xlu0 %v390, 16
      %v395 = vpop.permute.xlu0 %394
      %396 = vrot.lane.b32.xlu0 %v391, 16
      %v397 = vpop.permute.xlu0 %396
      %vm400 = vcmask 392448
      %401 = vst.msk [vmem:[#allocation2] sm:$0xff] %vm400, %v395
      %vm402 = vcmask 391424
      %403 = vst.msk [vmem:[#allocation2 + $0x8] sm:$0x7f] %vm402, %v397
      %v404 = vld [vmem:[%s338] sm:$0x3]
      %vm405 = vcmp.gt.f32.partialorder %v404, 0.0
      %v406 = vmin.f32 %v404, 0.0
      %v407 = vmul.f32 %v406, 1.442695
      %v408 = vpow.pop %v407
      %v409 = vsub.f32 %v408, 1.0
      %v410 = vsel %vm405, %v404, %v409
      %vm411 = vcmask 122880
      %412 = vst.msk [vmem:[#allocation2] sm:$0x1] %vm411, %v410
      %414 = vrot.lane.b32.xlu0 %v410, 32
      %v415 = vpop.permute.xlu0 %414
      %vm417 = vcmask 386305
      %418 = vst.msk [vmem:[#allocation2 + $0xe] sm:$0x2] %vm417, %v415
      %v419 = vld [vmem:[#allocation2] sm:$0xff]
      %v420 = vld [vmem:[#allocation2 + $0x8] sm:$0xff]
      %v421 = vld [vmem:[%s2] sm:$0xff]
      %v422 = vld [vmem:[%s2 + $0x8] sm:$0xff]
      %v423 = vld [vmem:[%s2 + $0x10] sm:$0xff]
      %v424 = vld [vmem:[%s2 + $0x18] sm:$0xff]
      %v425 = vld [vmem:[%s2 + $0x20] sm:$0xff]
      %v426 = vld [vmem:[%s2 + $0x28] sm:$0xff]
      %v427 = vld [vmem:[%s3] sm:$0x1]
      %v429 = vperm.slane %v427, 0
      %vm431 = vcmask 392192
      %v433 = vsel %vm431, %v419, 0
      %v436 = vsel %vm431, %v420, 0
      %438 = vmatpush.msra.mxu0 0.0
      %439 = vmatpush.msra.mxu0 0.0
      %440 = vmatpush.msra.mxu0 0.0
      %441 = vmatpush.msra.mxu0 0.0
      %442 = vmatpush.msra.mxu0 0.0
      %443 = vmatpush.msra.mxu0 0.0
      %444 = vmatpush.msra.mxu0 0.0
      %445 = vmatpush.msra.mxu0 0.0
      %446 = vmatpush.msra.mxu0 0.0
      %447 = vmatpush.msra.mxu0 0.0
      %448 = vmatpush.msra.mxu0 %v426
      %449 = vmatpush.msra.mxu0 %v425
      %450 = vmatpush.msra.mxu0 %v424
      %451 = vmatpush.msra.mxu0 %v423
      %452 = vmatpush.msra.mxu0 %v422
      %453 = vmatpush.msra.mxu0 %v421
      %454 = vmatmul.f32.gmra.mxu0 %v433
      %v455 = vpop.f32.mrf.mxu0
      %v456 = vadd.f32 %v429, %v455
      %457 = vmatmul.f32.gmra.mxu0 %v436
      %v458 = vpop.f32.mrf.mxu0
      %v459 = vadd.f32 %v429, %v458
      %460 = vdwg.mxu0
      %vm461 = vcmp.gt.f32.partialorder %v456, 0.0
      %vm462 = vcmp.gt.f32.partialorder %v459, 0.0
      %v463 = vmin.f32 %v456, 0.0
      %v464 = vmin.f32 %v459, 0.0
      %v465 = vmul.f32 %v463, 1.442695
      %v466 = vpow.pop %v465
      %v467 = vmul.f32 %v464, 1.442695
      %v468 = vpow.pop %v467
      %v469 = vsub.f32 %v466, 1.0
      %v470 = vsub.f32 %v468, 1.0
      %v471 = vsel %vm461, %v456, %v469
      %v472 = vsel %vm462, %v459, %v470
      %v473 = vld [vmem:[%s4] sm:$0xff]
      %vm474 = vcmask 64512
      %v476 = vsel %vm474, %v471, 0
      %v479 = vsel %vm474, %v472, 0
      %481 = vmatpush.msra.mxu0 0.0
      %482 = vmatpush.msra.mxu0 0.0
      %483 = vmatpush.msra.mxu0 0.0
      %484 = vmatpush.msra.mxu0 0.0
      %485 = vmatpush.msra.mxu0 0.0
      %486 = vmatpush.msra.mxu0 0.0
      %487 = vmatpush.msra.mxu0 0.0
      %488 = vmatpush.msra.mxu0 0.0
      %489 = vmatpush.msra.mxu0 0.0
      %490 = vmatpush.msra.mxu0 0.0
      %491 = vmatpush.msra.mxu0 0.0
      %492 = vmatpush.msra.mxu0 0.0
      %493 = vmatpush.msra.mxu0 0.0
      %494 = vmatpush.msra.mxu0 0.0
      %495 = vmatpush.msra.mxu0 0.0
      %496 = vmatpush.msra.mxu0 %v473
      %497 = vmatmul.f32.gmra.mxu0 %v476
      %v498 = vpop.f32.mrf.mxu0
      %v499 = vadd.f32 0.0, %v498
      %500 = vmatmul.f32.gmra.mxu0 %v479
      %v501 = vpop.f32.mrf.mxu0
      %v502 = vadd.f32 0.0, %v501
      %503 = vdwg.mxu0
      %v505 = vsel %vm386, %v349, 0
      %v508 = vsel %vm386, %v350, 0
      %510 = vmatpush.msra.mxu0 0.0
      %511 = vmatpush.msra.mxu0 0.0
      %512 = vmatpush.msra.mxu0 0.0
      %513 = vmatpush.msra.mxu0 0.0
      %514 = vmatpush.msra.mxu0 0.0
      %515 = vmatpush.msra.mxu0 0.0
      %516 = vmatpush.msra.mxu0 0.0
      %517 = vmatpush.msra.mxu0 0.0
      %518 = vmatpush.msra.mxu0 0.0
      %519 = vmatpush.msra.mxu0 0.0
      %520 = vmatpush.msra.mxu0 0.0
      %521 = vmatpush.msra.mxu0 0.0
      %522 = vmatpush.msra.mxu0 0.0
      %523 = vmatpush.msra.mxu0 0.0
      %524 = vmatpush.msra.mxu0 %v375
      %525 = vmatpush.msra.mxu0 %v374
      %526 = vmatmul.f32.gmra.mxu0 %v505
      %v527 = vpop.f32.mrf.mxu0
      %v528 = vadd.f32 %v499, %v527
      %529 = vmatmul.f32.gmra.mxu0 %v508
      %v530 = vpop.f32.mrf.mxu0
      %v531 = vadd.f32 %v502, %v530
      %532 = vdwg.mxu0
      %v533 = vld [vmem:[%s5] sm:$0x1]
      %v535 = vperm.slane %v533, 0
      %v537 = vadd.f32 %v528, %v535
      %v538 = vadd.f32 %v531, %v535
      %539 = vst.msk [vmem:[%s347] sm:$0xff] %vm386, %v537
      %540 = vst.msk [vmem:[%s347 + $0x8] sm:$0xff] %vm386, %v538
      %s541 = smul.u32 2, %s23
      %p542 = scmp.lt.s32.totalorder %s22, 1
      %s543 = scalar_select %p542, %s22, 1
      %p544 = scmp.lt.s32.totalorder %s541, 7
      %s545 = scalar_select %p544, %s541, 7
      %s546 = smul.addr %s543, 8
      %s547 = sadd.s32 %s545, %s546
      %s548 = smul.addr %s547, 8
      %s549 = scalar_lea.vmem %s7, %s548
      // Predicated region
      $region49: #{tpu_custom_call.1} parent=47 // pred_check
        %p550 = pneg %p211
      $region50: #{tpu_custom_call.1} parent=47 // pred_check_branch
        %552 = sbr.rel (%p550) target = $region52
      $region51: #{tpu_custom_call.1} parent=47 // pred_region
        %s553 = smul.u32 2, %s23
      $region52: #{tpu_custom_call.1} parent=47 // pred_fallthru
        _
    $region48: #{tpu_custom_call.1} parent=5 // pred_fallthru
      _
    %p554 = scmp.le.s32.totalorder 2, %s13
    // Predicated region
    $region53: #{tpu_custom_call.1} parent=5 // pred_check
      %p555 = pneg %p554
    $region54: #{tpu_custom_call.1} parent=5 // pred_check_branch
      %557 = sbr.rel (%p555) target = $region56
    $region55: #{tpu_custom_call.1} parent=5 // pred_region
      %s558 = ssub.s32 %s13, 2
      // Predicated region
      $region57: #{tpu_custom_call.1} parent=55 // pred_check
        %p559 = pneg %p217
      $region58: #{tpu_custom_call.1} parent=55 // pred_check_branch
        %561 = sbr.rel (%p559) target = $region60
      $region59: #{tpu_custom_call.1} parent=55 // pred_region
        %s562 = smul.u32 2, %s25
        %p563 = scmp.lt.s32.totalorder %s24, 1
        %s564 = scalar_select %p563, %s24, 1
        %p565 = scmp.lt.s32.totalorder %s562, 7
        %s566 = scalar_select %p565, %s562, 7
        %s567 = smul.addr %s564, 8
        %s568 = sadd.s32 %s566, %s567
        %s569 = smul.addr %s568, 8
        %s570 = scalar_lea.vmem %s7, %s569
      $region60: #{tpu_custom_call.1} parent=55 // pred_fallthru
        _
    $region56: #{tpu_custom_call.1} parent=5 // pred_fallthru
      _
  $region6: #{tpu_custom_call.1} parent=0 // loop_footer
    %s17 = sadd.s32 1, %s13
  $region7: #{tpu_custom_call.1} parent=0 // loop_footer_branch
    %12 = sbr.rel target = $region3
  $region8: #{tpu_custom_call.1} parent=0 // loop_exit
    _

</llo_original>
